<compile_context>
chip_gen: v5e
topology: v5e:2x2
jax: 0.10.0
libtpu: 0.0.40
codegen_flags: <defaults>
</compile_context>

<pallas_src>
import jax
import jax.numpy as jnp
from jax.experimental import pallas as pl
from jax.experimental.pallas import tpu as pltpu


def _self_grouping_loss_kernel(x_ref, o_ref):
    x = x_ref[...].astype(jnp.float32)          # (N, C), cast in-register
    N, C = x.shape
    inv_n = 1.0 / N

    # --- step 1: probability check (scalar predicate) ---
    need_softmax = jnp.abs(1.0 - jnp.sum(x) * inv_n) > 1e-3

    def _targets_onehot(p):
        # argmax(p - mean_over_batch(p)); the /C + 1/C affine transform is
        # monotone so it is dropped with bit-identical targets.
        d = p - jnp.sum(p, axis=0, keepdims=True) * inv_n
        col = jax.lax.broadcasted_iota(jnp.int32, p.shape, 1)
        d_max = jnp.max(d, axis=-1, keepdims=True)
        # first-occurrence tie-break (torch argmax semantics)
        idx = jnp.min(jnp.where(d >= d_max, col, C), axis=-1, keepdims=True)
        return col == idx                                       # (N, C) bool

    # --- softmax branch: p = softmax(x); logp_picked = x_picked - logz ---
    @pl.when(need_softmax)
    def _():
        x_max = jnp.max(x, axis=-1, keepdims=True)              # (N, 1)
        ex = jnp.exp(x - x_max)                                 # (N, C) EUP
        denom = jnp.sum(ex, axis=-1, keepdims=True)             # (N, 1)
        p = ex * pl.reciprocal(denom, approx=True)              # EUP recip, not VPU div
        logz = x_max + jnp.log(denom)                           # (N, 1), N logs only
        onehot = _targets_onehot(p)
        x_picked = jnp.sum(jnp.where(onehot, x, 0.0), axis=-1, keepdims=True)
        logp = x_picked - logz                                  # underflow-proof
        o_ref[0, 0] = -jnp.sum(logp) * inv_n

    # --- identity branch: inputs already probabilities; N logs on gathered values ---
    @pl.when(jnp.logical_not(need_softmax))
    def _():
        onehot = _targets_onehot(x)
        p_picked = jnp.sum(jnp.where(onehot, x, 0.0), axis=-1, keepdims=True)
        logp = jnp.log(p_picked)                                # matches torch (-inf/NaN on bad rows)
        o_ref[0, 0] = -jnp.sum(logp) * inv_n


def self_grouping_loss(inputs: jax.Array) -> jax.Array:
    """inputs: (N, C) logits or probabilities (any float dtype). Returns scalar loss."""
    N, C = inputs.shape
    cost = pl.CostEstimate(
        flops=6 * N * C,                       # softmax + mean + argmax + gather
        transcendentals=N * C + 2 * N,         # exp(N*C) + log/recip per row
        bytes_accessed=N * C * inputs.dtype.itemsize + 4,
    )
    out = pl.pallas_call(
        _self_grouping_loss_kernel,
        out_shape=jax.ShapeDtypeStruct((1, 1), jnp.float32),
        in_specs=[pl.BlockSpec(memory_space=pltpu.MemorySpace.VMEM)],
        out_specs=pl.BlockSpec(memory_space=pltpu.MemorySpace.SMEM),
        cost_estimate=cost,
    )(inputs)   # native dtype: no wrapper-side upcast / extra HBM convert pass
    return out.reshape(())


def _reference(inputs: jnp.ndarray) -> jnp.ndarray:
    # Pure-JAX reference mirroring the PyTorch forward (targets=None).
    x = inputs.astype(jnp.float32)
    N, C = x.shape
    need_softmax = jnp.abs(1.0 - jnp.mean(jnp.sum(x, axis=-1))) > 1e-3
    p = jnp.where(need_softmax, jax.nn.softmax(x, axis=-1), x)
    E = jnp.mean(p, axis=0, keepdims=True)
    u = (p - E) / C + 1.0 / C
    tgt = jnp.argmax(u, axis=-1)
    logp = jnp.log(p)
    return -jnp.mean(logp[jnp.arange(N), tgt])


if __name__ == "__main__":
    key = jax.random.PRNGKey(0)
    N, C = 8, 32

    # raw logits (not normalized) -> exercises the softmax branch
    logits = jax.random.normal(key, (N, C), dtype=jnp.float32)
    loss = self_grouping_loss(logits)
    jax.block_until_ready(loss)
    ref = _reference(logits)
    assert jnp.allclose(loss, ref, rtol=1e-4, atol=1e-5), (loss, ref)

    # already-a-probability branch (softmax is skipped inside the kernel)
    probs = jax.nn.softmax(jax.random.normal(jax.random.PRNGKey(1), (N, C)), axis=-1)
    loss2 = self_grouping_loss(probs)
    jax.block_until_ready(loss2)
    ref2 = _reference(probs)
    assert jnp.allclose(loss2, ref2, rtol=1e-4, atol=1e-5), (loss2, ref2)

    # native bf16 input: half the DMA bytes, cast to f32 inside the kernel
    logits_bf16 = logits.astype(jnp.bfloat16)
    loss3 = self_grouping_loss(logits_bf16)
    jax.block_until_ready(loss3)
    ref3 = _reference(logits_bf16.astype(jnp.float32))
    assert jnp.allclose(loss3, ref3, rtol=1e-3, atol=1e-4), (loss3, ref3)

    print("KERNEL_OK")
</pallas_src>

<mosaic_0001>
module attributes {stable_mosaic.version = 11 : i64} {
  func.func @_self_grouping_loss_kernel(%arg0: memref<8x32xf32, #tpu.memory_space<vmem>>, %arg1: memref<1x1xf32, #tpu.memory_space<smem>>) attributes {dimension_semantics = [], scalar_prefetch = 0 : i64, scratch_operands = 0 : i64, tpu.core_type = #tpu.core_type<tc>} {
    %c0 = arith.constant 0 : index
    %c0_0 = arith.constant 0 : index
    %0 = vector.load %arg0[%c0, %c0_0] : memref<8x32xf32, #tpu.memory_space<vmem>>, vector<8x32xf32>
    %1 = vector.shape_cast %0 : vector<8x32xf32> to vector<1x8x32xf32>
    %cst = arith.constant dense<0.000000e+00> : vector<1xf32>
    %2 = vector.multi_reduction <add>, %1, %cst [1, 2] : vector<1x8x32xf32> to vector<1xf32>
    %3 = vector.shape_cast %2 : vector<1xf32> to vector<1x1x1xf32>
    %4 = vector.extract %3[0, 0, 0] : f32 from vector<1x1x1xf32>
    %cst_1 = arith.constant 1.250000e-01 : f32
    %5 = arith.mulf %4, %cst_1 : f32
    %cst_2 = arith.constant 1.000000e+00 : f32
    %6 = arith.subf %cst_2, %5 : f32
    %7 = math.absf %6 : f32
    %cst_3 = arith.constant 1.000000e-03 : f32
    %8 = arith.cmpf ogt, %7, %cst_3 : f32
    %9 = arith.extui %8 : i1 to i32
    %c0_i32 = arith.constant 0 : i32
    %10 = arith.cmpi ne, %9, %c0_i32 : i32
    scf.if %10 {
      %cst_5 = arith.constant dense<0xFF800000> : vector<8xf32>
      %14 = vector.multi_reduction <maximumf>, %0, %cst_5 [1] : vector<8x32xf32> to vector<8xf32>
      %15 = vector.shape_cast %14 : vector<8xf32> to vector<8x1xf32>
      %16 = vector.broadcast %15 : vector<8x1xf32> to vector<8x32xf32>
      %17 = arith.subf %0, %16 : vector<8x32xf32>
      %18 = math.exp %17 : vector<8x32xf32>
      %cst_6 = arith.constant dense<0.000000e+00> : vector<8xf32>
      %19 = vector.multi_reduction <add>, %18, %cst_6 [1] : vector<8x32xf32> to vector<8xf32>
      %20 = vector.shape_cast %19 : vector<8xf32> to vector<8x1xf32>
      %21 = tpu.reciprocal %20 {approx = true} : vector<8x1xf32> -> vector<8x1xf32>
      %22 = vector.broadcast %21 : vector<8x1xf32> to vector<8x32xf32>
      %23 = arith.mulf %18, %22 : vector<8x32xf32>
      %24 = math.log %20 : vector<8x1xf32>
      %25 = arith.addf %15, %24 : vector<8x1xf32>
      %cst_7 = arith.constant dense<0.000000e+00> : vector<32xf32>
      %26 = vector.multi_reduction <add>, %23, %cst_7 [0] : vector<8x32xf32> to vector<32xf32>
      %27 = vector.shape_cast %26 : vector<32xf32> to vector<1x32xf32>
      %cst_8 = arith.constant 1.250000e-01 : f32
      %28 = vector.broadcast %cst_8 : f32 to vector<1x32xf32>
      %29 = arith.mulf %27, %28 : vector<1x32xf32>
      %30 = vector.broadcast %29 : vector<1x32xf32> to vector<8x32xf32>
      %31 = arith.subf %23, %30 : vector<8x32xf32>
      %32 = tpu.iota {dimensions = array<i32: 1>} : vector<8x32xi32>
      %cst_9 = arith.constant dense<0xFF800000> : vector<8xf32>
      %33 = vector.multi_reduction <maximumf>, %31, %cst_9 [1] : vector<8x32xf32> to vector<8xf32>
      %34 = vector.shape_cast %33 : vector<8xf32> to vector<8x1xf32>
      %35 = vector.broadcast %34 : vector<8x1xf32> to vector<8x32xf32>
      %36 = arith.cmpf oge, %31, %35 : vector<8x32xf32>
      %c32_i32 = arith.constant 32 : i32
      %37 = vector.broadcast %c32_i32 : i32 to vector<8x32xi32>
      %38 = arith.select %36, %32, %37 : vector<8x32xi1>, vector<8x32xi32>
      %cst_10 = arith.constant dense<2147483647> : vector<8xi32>
      %39 = vector.multi_reduction <minsi>, %38, %cst_10 [1] : vector<8x32xi32> to vector<8xi32>
      %40 = vector.shape_cast %39 : vector<8xi32> to vector<8x1xi32>
      %41 = vector.broadcast %40 : vector<8x1xi32> to vector<8x32xi32>
      %42 = arith.cmpi eq, %32, %41 : vector<8x32xi32>
      %cst_11 = arith.constant 0.000000e+00 : f32
      %43 = vector.broadcast %cst_11 : f32 to vector<8x32xf32>
      %44 = arith.select %42, %0, %43 : vector<8x32xi1>, vector<8x32xf32>
      %cst_12 = arith.constant dense<0.000000e+00> : vector<8xf32>
      %45 = vector.multi_reduction <add>, %44, %cst_12 [1] : vector<8x32xf32> to vector<8xf32>
      %46 = vector.shape_cast %45 : vector<8xf32> to vector<8x1xf32>
      %47 = arith.subf %46, %25 : vector<8x1xf32>
      %48 = vector.shape_cast %47 : vector<8x1xf32> to vector<1x8x1xf32>
      %cst_13 = arith.constant dense<0.000000e+00> : vector<1xf32>
      %49 = vector.multi_reduction <add>, %48, %cst_13 [1, 2] : vector<1x8x1xf32> to vector<1xf32>
      %50 = vector.shape_cast %49 : vector<1xf32> to vector<1x1x1xf32>
      %51 = vector.extract %50[0, 0, 0] : f32 from vector<1x1x1xf32>
      %cst_14 = arith.constant 0.000000e+00 : f32
      %52 = arith.subf %cst_14, %51 : f32
      %cst_15 = arith.constant 1.250000e-01 : f32
      %53 = arith.mulf %52, %cst_15 : f32
      %c0_16 = arith.constant 0 : index
      %c0_17 = arith.constant 0 : index
      %54 = memref.load %arg1[%c0_16, %c0_17] : memref<1x1xf32, #tpu.memory_space<smem>>
      memref.store %53, %arg1[%c0_16, %c0_17] : memref<1x1xf32, #tpu.memory_space<smem>>
    } else {
    }
    %true = arith.constant true
    %11 = arith.xori %8, %true : i1
    %12 = arith.extui %11 : i1 to i32
    %c0_i32_4 = arith.constant 0 : i32
    %13 = arith.cmpi ne, %12, %c0_i32_4 : i32
    scf.if %13 {
      %cst_5 = arith.constant dense<0.000000e+00> : vector<32xf32>
      %14 = vector.multi_reduction <add>, %0, %cst_5 [0] : vector<8x32xf32> to vector<32xf32>
      %15 = vector.shape_cast %14 : vector<32xf32> to vector<1x32xf32>
      %cst_6 = arith.constant 1.250000e-01 : f32
      %16 = vector.broadcast %cst_6 : f32 to vector<1x32xf32>
      %17 = arith.mulf %15, %16 : vector<1x32xf32>
      %18 = vector.broadcast %17 : vector<1x32xf32> to vector<8x32xf32>
      %19 = arith.subf %0, %18 : vector<8x32xf32>
      %20 = tpu.iota {dimensions = array<i32: 1>} : vector<8x32xi32>
      %cst_7 = arith.constant dense<0xFF800000> : vector<8xf32>
      %21 = vector.multi_reduction <maximumf>, %19, %cst_7 [1] : vector<8x32xf32> to vector<8xf32>
      %22 = vector.shape_cast %21 : vector<8xf32> to vector<8x1xf32>
      %23 = vector.broadcast %22 : vector<8x1xf32> to vector<8x32xf32>
      %24 = arith.cmpf oge, %19, %23 : vector<8x32xf32>
      %c32_i32 = arith.constant 32 : i32
      %25 = vector.broadcast %c32_i32 : i32 to vector<8x32xi32>
      %26 = arith.select %24, %20, %25 : vector<8x32xi1>, vector<8x32xi32>
      %cst_8 = arith.constant dense<2147483647> : vector<8xi32>
      %27 = vector.multi_reduction <minsi>, %26, %cst_8 [1] : vector<8x32xi32> to vector<8xi32>
      %28 = vector.shape_cast %27 : vector<8xi32> to vector<8x1xi32>
      %29 = vector.broadcast %28 : vector<8x1xi32> to vector<8x32xi32>
      %30 = arith.cmpi eq, %20, %29 : vector<8x32xi32>
      %cst_9 = arith.constant 0.000000e+00 : f32
      %31 = vector.broadcast %cst_9 : f32 to vector<8x32xf32>
      %32 = arith.select %30, %0, %31 : vector<8x32xi1>, vector<8x32xf32>
      %cst_10 = arith.constant dense<0.000000e+00> : vector<8xf32>
      %33 = vector.multi_reduction <add>, %32, %cst_10 [1] : vector<8x32xf32> to vector<8xf32>
      %34 = vector.shape_cast %33 : vector<8xf32> to vector<8x1xf32>
      %35 = math.log %34 : vector<8x1xf32>
      %36 = vector.shape_cast %35 : vector<8x1xf32> to vector<1x8x1xf32>
      %cst_11 = arith.constant dense<0.000000e+00> : vector<1xf32>
      %37 = vector.multi_reduction <add>, %36, %cst_11 [1, 2] : vector<1x8x1xf32> to vector<1xf32>
      %38 = vector.shape_cast %37 : vector<1xf32> to vector<1x1x1xf32>
      %39 = vector.extract %38[0, 0, 0] : f32 from vector<1x1x1xf32>
      %cst_12 = arith.constant 0.000000e+00 : f32
      %40 = arith.subf %cst_12, %39 : f32
      %cst_13 = arith.constant 1.250000e-01 : f32
      %41 = arith.mulf %40, %cst_13 : f32
      %c0_14 = arith.constant 0 : index
      %c0_15 = arith.constant 0 : index
      %42 = memref.load %arg1[%c0_14, %c0_15] : memref<1x1xf32, #tpu.memory_space<smem>>
      memref.store %41, %arg1[%c0_14, %c0_15] : memref<1x1xf32, #tpu.memory_space<smem>>
    } else {
    }
    return
  }
}

</mosaic_0001>

<llo_original>
// kernel: tpu_custom_call.1
$region0: #{tpu_custom_call.1}
  #allocation0 [shape = 'u32[]', space=smem, size = 0x4, offset = 0x4, fixed_abs, tag = 'smem constant byte address 0x4 - core index']
  #allocation1 [shape = 'u32[72,128]{1,0:T(1,128)}', space=vmem, size = 0x9000, scoped, tag = 'internal scratch']
  %s0 = inlined_call_operand.hbm [shape: f32[8,32], index: 0, kind: input, shape index: {}]
  %s1 = inlined_call_operand.hbm [shape: f32[1,1], index: 1, kind: output, shape index: {}]
  %s2 = sld [smem:[#allocation0]]
  $region26: #{tpu_custom_call.1} parent=0
    _
  %s4 = ssub.s32 1, %s2
  %s5 = scalar_select 0, %s4, %s2
  $region1: #{tpu_custom_call.1} parent=0
    #allocation2 [shape = 'u8[4096]{0}', space=vmem, size = 0x1000, scoped, tag = 'input window, operand 0, single buffered']
    #allocation3 [shape = 's32[1]{0}', space=sflag, size = 0x4, scoped, tag = 'scoped memory for tpu_custom_call.1']
    #allocation4 [shape = 's32[1]{0}', space=sflag, size = 0x4, scoped, tag = 'scoped memory for tpu_custom_call.1']
    #allocation5 [shape = 'u8[512]{0}', space=smem, size = 0x200, scoped, tag = 'output window, operand 0, single buffered']
    %6 = vsyncpa [#allocation3], 0
    %7 = vsyncpa [#allocation4], 0
    // Predicated region
    $region2: #{tpu_custom_call.1} parent=1 // pred_check
      _
    $region3: #{tpu_custom_call.1} parent=1 // pred_check_branch
      %9 = sbr.rel (0) target = $region5
    $region4: #{tpu_custom_call.1} parent=1 // pred_region
      %11 = vsyncadd [#allocation3], 0
      %s13 = sshll.u32 %s0, 4
      %s14 = int_to_ptr.hbm [resolvable:$true] %s13
      %s15 = sshll.u32 [#allocation2], 4
      %s16 = int_to_ptr.vmem [resolvable:$true] %s15
      %18 = dma.hbm_to_vmem [thread:$0]  %s14, 128, %s16, [#allocation3]
    $region5: #{tpu_custom_call.1} parent=1 // pred_fallthru
      _
    // Predicated region
    $region6: #{tpu_custom_call.1} parent=1 // pred_check
      _
    $region7: #{tpu_custom_call.1} parent=1 // pred_check_branch
      %20 = sbr.rel (0) target = $region9
    $region8: #{tpu_custom_call.1} parent=1 // pred_region
      %22 = dma.done [#allocation3], 128
    $region9: #{tpu_custom_call.1} parent=1 // pred_fallthru
      _
    %v23 = vld [vmem:[#allocation2] sm:$0xff]
    %vm24 = vcmask 261120
    %v25 = vsel %vm24, %v23, 0.0
    %26 = vadd.xlane.f32.xlu0 %v25
    %v27 = vpop.xlane.xlu0 %26
    %v28 = vrot.slane %v27, 4
    %v29 = vadd.f32 %v27, %v28
    %v30 = vrot.slane %v29, 2
    %v31 = vadd.f32 %v29, %v30
    %v32 = vrot.slane %v31, 1
    %v33 = vadd.f32 %v31, %v32
    %s34 = vtos %v33
    %s35 = smul.f32 %s34, 0.125
    %s36 = ssub.f32 1.0, %s35
    %s37 = sand.u32 2147483647, %s36
    %p38 = scmp.gt.f32.partialorder %s37, 0.001
    // Predicated region
    $region10: #{tpu_custom_call.1} parent=1 // pred_check
      %p39 = pneg %p38
    $region11: #{tpu_custom_call.1} parent=1 // pred_check_branch
      %41 = sbr.rel (%p39) target = $region13
    $region12: #{tpu_custom_call.1} parent=1 // pred_region
      %v42 = vsel %vm24, %v23, -inf
      %43 = vmax.xlane.f32.xlu0 %v42
      %v44 = vpop.xlane.xlu0 %43
      %v45 = vsub.f32 %v23, %v44
      %v46 = vmul.f32 %v45, 1.442695
      %v47 = vpow.pop %v46
      %v48 = vsel %vm24, %v47, 0.0
      %49 = vadd.xlane.f32.xlu0 %v48
      %v50 = vpop.xlane.xlu0 %49
      %v51 = vrcp.pop %v50
      %v52 = vmul.f32 %v47, %v51
      %v53 = vlog2.pop %v50
      %v54 = vmul.f32 %v53, 0.6931472
      %v55 = vadd.f32 %v44, %v54
      %v56 = vsel %vm24, %v52, 0.0
      %v57 = vrot.slane %v56, 4
      %v58 = vadd.f32 %v56, %v57
      %v59 = vrot.slane %v58, 2
      %v60 = vadd.f32 %v58, %v59
      %v61 = vrot.slane %v60, 1
      %v62 = vadd.f32 %v60, %v61
      %v63 = vmul.f32 %v62, 0.125
      %v64 = vsub.f32 %v52, %v63
      %v65 = vlaneseq
      %v66 = vand.u32 %v65, 127
      %v67 = vsel %vm24, %v64, -inf
      %68 = vmax.xlane.f32.xlu0 %v67
      %v69 = vpop.xlane.xlu0 %68
      %vm70 = vcmp.ge.f32.partialorder %v64, %v69
      %v71 = vsel %vm70, %v66, 32
      %v72 = vsel %vm24, %v71, 2147483647
      %v73 = vand.u32 %v72, 65535
      %v74 = vshra.s32 %v72, 16
      %v75 = vcvt.s32.f32 %v73
      %v76 = vcvt.s32.f32 %v74
      %77 = vmin.xlane.f32.xlu0 %v76
      %v78 = vpop.xlane.xlu0 %77
      %vm79 = vcmp.eq.f32.partialorder %v76, %v78
      %v80 = vsel %vm79, %v75, inf
      %81 = vmin.xlane.f32.xlu0 %v80
      %v82 = vpop.xlane.xlu0 %81
      %v83 = vcvt.f32.s32 %v82
      %v84 = vcvt.f32.s32 %v78
      %v85 = vshll.u32 %v84, 16
      %v86 = vadd.s32 %v85, %v83
      %vm87 = vcmp.eq.s32.totalorder %v66, %v86
      %v88 = vsel %vm87, %v23, 0.0
      %v89 = vsel %vm24, %v88, 0.0
      %90 = vadd.xlane.f32.xlu0 %v89
      %v91 = vpop.xlane.xlu0 %90
      %v92 = vsub.f32 %v91, %v55
      %vm93 = vcmask 7168
      %v94 = vsel %vm93, %v92, 0.0
      %95 = vadd.xlane.f32.xlu0 %v94
      %v96 = vpop.xlane.xlu0 %95
      %v97 = vrot.slane %v96, 4
      %v98 = vadd.f32 %v96, %v97
      %v99 = vrot.slane %v98, 2
      %v100 = vadd.f32 %v98, %v99
      %v101 = vrot.slane %v100, 1
      %v102 = vadd.f32 %v100, %v101
      %s103 = vtos %v102
      %s104 = ssub.f32 0.0, %s103
      %s105 = smul.f32 %s104, 0.125
      %s106 = scalar_lea.smem [#allocation5], 0
      %107 = sst [smem:[%s106]] %s105
    $region13: #{tpu_custom_call.1} parent=1 // pred_fallthru
      _
    %p108 = pneg %p38
    // Predicated region
    $region14: #{tpu_custom_call.1} parent=1 // pred_check
      _
    $region15: #{tpu_custom_call.1} parent=1 // pred_check_branch
      %110 = sbr.rel (%p38) target = $region17
    $region16: #{tpu_custom_call.1} parent=1 // pred_region
      %v111 = vrot.slane %v25, 4
      %v112 = vadd.f32 %v25, %v111
      %v113 = vrot.slane %v112, 2
      %v114 = vadd.f32 %v112, %v113
      %v115 = vrot.slane %v114, 1
      %v116 = vadd.f32 %v114, %v115
      %v117 = vmul.f32 %v116, 0.125
      %v118 = vsub.f32 %v23, %v117
      %v119 = vlaneseq
      %v120 = vand.u32 %v119, 127
      %v121 = vsel %vm24, %v118, -inf
      %122 = vmax.xlane.f32.xlu0 %v121
      %v123 = vpop.xlane.xlu0 %122
      %vm124 = vcmp.ge.f32.partialorder %v118, %v123
      %v125 = vsel %vm124, %v120, 32
      %v126 = vsel %vm24, %v125, 2147483647
      %v127 = vand.u32 %v126, 65535
      %v128 = vshra.s32 %v126, 16
      %v129 = vcvt.s32.f32 %v127
      %v130 = vcvt.s32.f32 %v128
      %131 = vmin.xlane.f32.xlu0 %v130
      %v132 = vpop.xlane.xlu0 %131
      %vm133 = vcmp.eq.f32.partialorder %v130, %v132
      %v134 = vsel %vm133, %v129, inf
      %135 = vmin.xlane.f32.xlu0 %v134
      %v136 = vpop.xlane.xlu0 %135
      %v137 = vcvt.f32.s32 %v136
      %v138 = vcvt.f32.s32 %v132
      %v139 = vshll.u32 %v138, 16
      %v140 = vadd.s32 %v139, %v137
      %vm141 = vcmp.eq.s32.totalorder %v120, %v140
      %v142 = vsel %vm141, %v23, 0.0
      %v143 = vsel %vm24, %v142, 0.0
      %144 = vadd.xlane.f32.xlu0 %v143
      %v145 = vpop.xlane.xlu0 %144
      %v146 = vlog2.pop %v145
      %v147 = vmul.f32 %v146, 0.6931472
      %vm148 = vcmask 7168
      %v149 = vsel %vm148, %v147, 0.0
      %150 = vadd.xlane.f32.xlu0 %v149
      %v151 = vpop.xlane.xlu0 %150
      %v152 = vrot.slane %v151, 4
      %v153 = vadd.f32 %v151, %v152
      %v154 = vrot.slane %v153, 2
      %v155 = vadd.f32 %v153, %v154
      %v156 = vrot.slane %v155, 1
      %v157 = vadd.f32 %v155, %v156
      %s158 = vtos %v157
      %s159 = ssub.f32 0.0, %s158
      %s160 = smul.f32 %s159, 0.125
      %s161 = scalar_lea.smem [#allocation5], 0
      %162 = sst [smem:[%s161]] %s160
    $region17: #{tpu_custom_call.1} parent=1 // pred_fallthru
      _
    // Predicated region
    $region18: #{tpu_custom_call.1} parent=1 // pred_check
      _
    $region19: #{tpu_custom_call.1} parent=1 // pred_check_branch
      %164 = sbr.rel (0) target = $region21
    $region20: #{tpu_custom_call.1} parent=1 // pred_region
      %166 = vsyncadd [#allocation4], 0
      %s168 = sshll.u32 %s1, 4
      %s169 = int_to_ptr.hbm [resolvable:$true] %s168
      %171 = dma.smem_to_hbm [#allocation5], 16, %s169, [#allocation4]
    $region21: #{tpu_custom_call.1} parent=1 // pred_fallthru
      _
    // Predicated region
    $region22: #{tpu_custom_call.1} parent=1 // pred_check
      _
    $region23: #{tpu_custom_call.1} parent=1 // pred_check_branch
      %173 = sbr.rel (0) target = $region25
    $region24: #{tpu_custom_call.1} parent=1 // pred_region
      %175 = dma.done [#allocation4], 16
    $region25: #{tpu_custom_call.1} parent=1 // pred_fallthru
      _
    %176 = sfence
    %177 = vsyncpa [#allocation3], 1
    %178 = vsyncpa [#allocation4], 1

</llo_original>
